<compile_context>
chip_gen: v7x
topology: tpu7x:2x2x1
jax: 0.10.0
libtpu: 0.0.40
codegen_flags: <defaults>
</compile_context>

<pallas_src>
import jax
import jax.numpy as jnp
from jax.experimental import pallas as pl
from jax.experimental.pallas import tpu as pltpu  # noqa: F401  (TPU backend)

_LANE = 128  # vreg lane width; pad packed output axis to this for dense stores


def _round_up(n, m):
    return ((n + m - 1) // m) * m


def _fused_multihead_kernel(x_ref, w_ref, b_ref, o_ref):
    # One MXU matmul over the concatenated weight slab + f32 bias add (VPU),
    # everything resident in VMEM in a single block.
    x = x_ref[...]                    # (B, in)
    w = w_ref[...]                    # (in, total_out_padded)
    b = b_ref[...]                    # (1,  total_out_padded)
    y = jnp.dot(x, w, preferred_element_type=jnp.float32) + b
    o_ref[...] = y.astype(o_ref.dtype)


def pack_multihead_params(params):
    """Concatenate per-head (w, b) into one lane-dense weight/bias slab.

    params: list of (w, b) with w: (in, out_i), b: (out_i,).
    Returns (w_cat, b_cat, out_sizes) with w_cat: (in, total_pad),
    b_cat: (1, total_pad), total_pad a multiple of 128 (zero-padded columns).
    """
    out_sizes = [int(w.shape[1]) for (w, _) in params]
    total = sum(out_sizes)
    total_pad = max(_round_up(total, _LANE), _LANE)

    w_cat = jnp.concatenate([w for (w, _) in params], axis=1)
    b_cat = jnp.concatenate([b for (_, b) in params], axis=0)
    pad = total_pad - total
    if pad:
        w_cat = jnp.pad(w_cat, ((0, 0), (0, pad)))
        b_cat = jnp.pad(b_cat, ((0, pad),))
    return w_cat, b_cat.reshape(1, total_pad), out_sizes


def multihead_forward(x, params):
    """Fused MultiHead forward.

    x: (batch, in_size).  params: list of (w, b), w: (in, out_i), b: (out_i,).
    Returns a list of per-head outputs [(batch, out_i), ...], matching the
    PyTorch module's forward semantics.
    """
    w_cat, b_cat, out_sizes = pack_multihead_params(params)
    batch, in_size = x.shape
    total = sum(out_sizes)
    total_pad = w_cat.shape[1]

    cost = pl.CostEstimate(
        flops=2 * batch * in_size * total,
        transcendentals=0,
        bytes_accessed=(x.size * x.dtype.itemsize
                        + w_cat.size * w_cat.dtype.itemsize
                        + b_cat.size * b_cat.dtype.itemsize
                        + batch * total_pad * x.dtype.itemsize),
    )

    packed = pl.pallas_call(
        _fused_multihead_kernel,
        out_shape=jax.ShapeDtypeStruct((batch, total_pad), x.dtype),
        # Single-block problem: every operand is one full-array VMEM block.
        in_specs=[
            pl.BlockSpec((batch, in_size), lambda: (0, 0)),
            pl.BlockSpec((in_size, total_pad), lambda: (0, 0)),
            pl.BlockSpec((1, total_pad), lambda: (0, 0)),
        ],
        out_specs=pl.BlockSpec((batch, total_pad), lambda: (0, 0)),
        cost_estimate=cost,
    )(x, w_cat, b_cat)

    # Slice the packed lane-dense slab back into per-head outputs (outside the
    # kernel; these are cheap XLA slices, no masked stores in the kernel).
    outs = []
    offset = 0
    for out in out_sizes:
        outs.append(packed[:, offset:offset + out])
        offset += out
    return outs


def init_multihead_params(key, in_size, out_sizes, dtype=jnp.float32):
    """Deterministic synthetic init (PyTorch Linear-style uniform bound 1/sqrt(in))."""
    params = []
    for i, out in enumerate(out_sizes):
        kw, kb = jax.random.split(jax.random.fold_in(key, i))
        bound = 1.0 / (in_size ** 0.5)
        # Stored as (in, out) == transpose of PyTorch's (out, in) weight.
        w = jax.random.uniform(kw, (in_size, out), dtype, minval=-bound, maxval=bound)
        b = jax.random.uniform(kb, (out,), dtype, minval=-bound, maxval=bound)
        params.append((w, b))
    return params


if __name__ == "__main__":
    key = jax.random.PRNGKey(0)
    batch, in_size = 8, 32          # batch multiple of 8 (sublane-aligned)
    out_sizes = [16, 24, 8]

    kx, kp = jax.random.split(key)
    x = jax.random.normal(kx, (batch, in_size), jnp.float32)
    params = init_multihead_params(kp, in_size, out_sizes)

    outs = multihead_forward(x, params)
    outs = [jax.block_until_ready(o) for o in outs]

    # Pure-JAX reference check of the same forward semantics.
    refs = [x @ w + b for (w, b) in params]
    for o, r, out in zip(outs, refs, out_sizes):
        assert o.shape == (batch, out), (o.shape, (batch, out))
        assert jnp.allclose(o, r, atol=1e-5, rtol=1e-5)

    print("KERNEL_OK")
</pallas_src>

<mosaic_0001>
module attributes {stable_mosaic.version = 11 : i64} {
  func.func @_fused_multihead_kernel(%arg0: memref<8x32xf32, #tpu.memory_space<vmem>>, %arg1: memref<32x128xf32, #tpu.memory_space<vmem>>, %arg2: memref<1x128xf32, #tpu.memory_space<vmem>>, %arg3: memref<8x128xf32, #tpu.memory_space<vmem>>) attributes {dimension_semantics = [], scalar_prefetch = 0 : i64, scratch_operands = 0 : i64, tpu.core_type = #tpu.core_type<tc>} {
    %c0 = arith.constant 0 : index
    %c0_0 = arith.constant 0 : index
    %0 = vector.load %arg0[%c0, %c0_0] : memref<8x32xf32, #tpu.memory_space<vmem>>, vector<8x32xf32>
    %c0_1 = arith.constant 0 : index
    %c0_2 = arith.constant 0 : index
    %1 = vector.load %arg1[%c0_1, %c0_2] : memref<32x128xf32, #tpu.memory_space<vmem>>, vector<32x128xf32>
    %c0_3 = arith.constant 0 : index
    %c0_4 = arith.constant 0 : index
    %2 = vector.load %arg2[%c0_3, %c0_4] : memref<1x128xf32, #tpu.memory_space<vmem>>, vector<1x128xf32>
    %cst = arith.constant dense<0.000000e+00> : vector<8x128xf32>
    %3 = tpu.matmul %0, %1, %cst {dimension_numbers = #tpu.dot_dimension_numbers<[1], [0], [0], [1], [0, 0, 1, 1], [], []>} : vector<8x32xf32>, vector<32x128xf32>, vector<8x128xf32> -> vector<8x128xf32>
    %4 = vector.broadcast %2 : vector<1x128xf32> to vector<8x128xf32>
    %5 = arith.addf %3, %4 : vector<8x128xf32>
    %c0_5 = arith.constant 0 : index
    %c0_6 = arith.constant 0 : index
    %6 = vector.load %arg3[%c0_5, %c0_6] : memref<8x128xf32, #tpu.memory_space<vmem>>, vector<8x128xf32>
    tpu.vector_store %arg3[%c0_5, %c0_6], %5 {strides = array<i32>} : memref<8x128xf32, #tpu.memory_space<vmem>>, vector<8x128xf32>,
    return
  }
}

</mosaic_0001>

<llo_original>
// kernel: tpu_custom_call.1
$region0: #{tpu_custom_call.1}
  #allocation0 [shape = 'u32[]', space=smem, size = 0x4, offset = 0x4, fixed_abs, tag = 'smem constant byte address 0x4 - core index']
  #allocation1 [shape = 'u32[144,128]{1,0:T(1,128)}', space=vmem, size = 0x12000, scoped, tag = 'internal scratch']
  %s0 = inlined_call_operand.hbm [shape: f32[8,32], index: 0, kind: input, shape index: {}]
  %s1 = inlined_call_operand.hbm [shape: f32[32,128], index: 1, kind: input, shape index: {}]
  %s2 = inlined_call_operand.vmem [shape: f32[1,128], index: 2, kind: input, shape index: {}]
  %s3 = inlined_call_operand.hbm [shape: f32[8,128], index: 3, kind: output, shape index: {}]
  %s4 = sld [smem:[#allocation0]]
  $region30: #{tpu_custom_call.1} parent=0
    _
  %s6 = ssub.s32 1, %s4
  %s7 = scalar_select 0, %s6, %s4
  $region1: #{tpu_custom_call.1} parent=0
    #allocation2 [shape = 'u8[4096]{0}', space=vmem, size = 0x1000, scoped, tag = 'input window, operand 0, single buffered']
    #allocation3 [shape = 's32[1]{0}', space=sflag, size = 0x4, scoped, tag = 'scoped memory for tpu_custom_call.1']
    #allocation4 [shape = 's32[1]{0}', space=sflag, size = 0x4, scoped, tag = 'scoped memory for tpu_custom_call.1']
    #allocation5 [shape = 'u8[16384]{0}', space=vmem, size = 0x4000, scoped, tag = 'input window, operand 1, single buffered']
    #allocation6 [shape = 's32[1]{0}', space=sflag, size = 0x4, scoped, tag = 'scoped memory for tpu_custom_call.1']
    #allocation7 [shape = 'u8[4096]{0}', space=vmem, size = 0x1000, scoped, tag = 'output window, operand 0, single buffered']
    %8 = vsyncpa [#allocation3], 0
    %9 = vsyncpa [#allocation6], 0
    %10 = vsyncpa [#allocation4], 0
    // Predicated region
    $region2: #{tpu_custom_call.1} parent=1 // pred_check
      _
    $region3: #{tpu_custom_call.1} parent=1 // pred_check_branch
      %12 = sbr.rel (0) target = $region5
    $region4: #{tpu_custom_call.1} parent=1 // pred_region
      %s14 = ssub.s32 128, 128
      %15 = vsyncadd [#allocation3], %s14
      %s17 = sshll.u32 [#allocation2], 4
      %s18 = int_to_ptr.vmem [resolvable:$true] %s17
      %20 = dma.hbm_to_vmem [thread:$0]  %s0, 128, %s18, [#allocation3]
    $region5: #{tpu_custom_call.1} parent=1 // pred_fallthru
      _
    // Predicated region
    $region6: #{tpu_custom_call.1} parent=1 // pred_check
      _
    $region7: #{tpu_custom_call.1} parent=1 // pred_check_branch
      %22 = sbr.rel (0) target = $region9
    $region8: #{tpu_custom_call.1} parent=1 // pred_region
      %s24 = ssub.s32 512, 512
      %25 = vsyncadd [#allocation6], %s24
      %s26 = sshll.u32 [#allocation5], 4
      %s27 = int_to_ptr.vmem [resolvable:$true] %s26
      %32 = dma.hbm_to_vmem [thread:$0]  %s1, 512, %s27, [#allocation6], 128, 128, 8
    $region9: #{tpu_custom_call.1} parent=1 // pred_fallthru
      _
    // Predicated region
    $region10: #{tpu_custom_call.1} parent=1 // pred_check
      _
    $region11: #{tpu_custom_call.1} parent=1 // pred_check_branch
      %34 = sbr.rel (0) target = $region13
    $region12: #{tpu_custom_call.1} parent=1 // pred_region
      _
    $region13: #{tpu_custom_call.1} parent=1 // pred_fallthru
      _
    // Predicated region
    $region14: #{tpu_custom_call.1} parent=1 // pred_check
      _
    $region15: #{tpu_custom_call.1} parent=1 // pred_check_branch
      %36 = sbr.rel (0) target = $region17
    $region16: #{tpu_custom_call.1} parent=1 // pred_region
      %37 = dma.done [#allocation3], 128
    $region17: #{tpu_custom_call.1} parent=1 // pred_fallthru
      _
    // Predicated region
    $region18: #{tpu_custom_call.1} parent=1 // pred_check
      _
    $region19: #{tpu_custom_call.1} parent=1 // pred_check_branch
      %39 = sbr.rel (0) target = $region21
    $region20: #{tpu_custom_call.1} parent=1 // pred_region
      %40 = dma.done [#allocation6], 512
    $region21: #{tpu_custom_call.1} parent=1 // pred_fallthru
      _
    %v41 = vld [vmem:[#allocation2] sm:$0xff]
    %v42 = vld [vmem:[#allocation5] sm:$0xff]
    %v43 = vld [vmem:[#allocation5 + $0x8] sm:$0xff]
    %v44 = vld [vmem:[#allocation5 + $0x10] sm:$0xff]
    %v45 = vld [vmem:[#allocation5 + $0x18] sm:$0xff]
    %v46 = vld [vmem:[%s2] sm:$0x1]
    %v48 = vlaneseq
    %v49 = vshrl.u32 %v48, 7
    %v50 = vsub.s32 0, %v49
    %v51 = vrot.slane %v46, %v50
    %vm53 = vcmask 261120
    %v55 = vsel %vm53, %v41, 0
    %57 = vmatprep.subr.mxu0 0.0
    %58 = vmatpush1.msra.mxu0 %v42
    %59 = vmatprep.subr.mxu0 0.0
    %60 = vmatpush1.msra.mxu0 %v43
    %61 = vmatprep.subr.mxu0 0.0
    %62 = vmatpush1.msra.mxu0 %v44
    %63 = vmatprep.subr.mxu0 0.0
    %64 = vmatpush1.msra.mxu0 %v45
    %65 = vmatprep.subr.mxu0 0.0
    %66 = vmatpush1.msra.mxu0 0.0
    %67 = vmatprep.subr.mxu0 0.0
    %68 = vmatpush1.msra.mxu0 0.0
    %69 = vmatprep.subr.mxu0 0.0
    %70 = vmatpush1.msra.mxu0 0.0
    %71 = vmatprep.subr.mxu0 0.0
    %72 = vmatpush1.msra.mxu0 0.0
    %73 = vmatprep.subr.mxu0 0.0
    %74 = vmatpush1.msra.mxu0 0.0
    %75 = vmatprep.subr.mxu0 0.0
    %76 = vmatpush1.msra.mxu0 0.0
    %77 = vmatprep.subr.mxu0 0.0
    %78 = vmatpush1.msra.mxu0 0.0
    %79 = vmatprep.subr.mxu0 0.0
    %80 = vmatpush1.msra.mxu0 0.0
    %81 = vmatprep.subr.mxu0 0.0
    %82 = vmatpush1.msra.mxu0 0.0
    %83 = vmatprep.subr.mxu0 0.0
    %84 = vmatpush1.msra.mxu0 0.0
    %85 = vmatprep.subr.mxu0 0.0
    %86 = vmatpush1.msra.mxu0 0.0
    %87 = vmatprep.subr.mxu0 0.0
    %88 = vmatpush1.msra.mxu0 0.0
    %89 = vmatprep.subr.mxu0 0.0
    %90 = vmatpush1.msra.mxu0 0.0
    %91 = vmatprep.subr.mxu0 0.0
    %92 = vmatpush1.msra.mxu0 0.0
    %93 = vmatprep.subr.mxu0 0.0
    %94 = vmatpush1.msra.mxu0 0.0
    %95 = vmatprep.subr.mxu0 0.0
    %96 = vmatpush1.msra.mxu0 0.0
    %97 = vmatprep.subr.mxu0 0.0
    %98 = vmatpush1.msra.mxu0 0.0
    %99 = vmatprep.subr.mxu0 0.0
    %100 = vmatpush1.msra.mxu0 0.0
    %101 = vmatprep.subr.mxu0 0.0
    %102 = vmatpush1.msra.mxu0 0.0
    %103 = vmatprep.subr.mxu0 0.0
    %104 = vmatpush1.msra.mxu0 0.0
    %105 = vmatprep.subr.mxu0 0.0
    %106 = vmatpush1.msra.mxu0 0.0
    %107 = vmatprep.subr.mxu0 0.0
    %108 = vmatpush1.msra.mxu0 0.0
    %109 = vmatprep.subr.mxu0 0.0
    %110 = vmatpush1.msra.mxu0 0.0
    %111 = vmatprep.subr.mxu0 0.0
    %112 = vmatpush1.msra.mxu0 0.0
    %113 = vmatprep.subr.mxu0 0.0
    %114 = vmatpush1.msra.mxu0 0.0
    %115 = vmatprep.subr.mxu0 0.0
    %116 = vmatpush1.msra.mxu0 0.0
    %117 = vmatprep.subr.mxu0 0.0
    %118 = vmatpush1.msra.mxu0 0.0
    %119 = vmatprep.subr.mxu0 0.0
    %120 = vmatpush1.msra.mxu0 0.0
    %121 = vmatprep.mubr.f32.mxu0 0.0
    %122 = vmatmul.mubr.f32.gmra.mrb[0].mxu0 %v55
    %v123 = vpop.f32.mrb[0].mxu0
    %v124 = vadd.f32 %v51, %v123
    %v125 = vpop.f32.mrb[0].mxu0
    %126 = vdwg.mxu0
    %127 = vst [vmem:[#allocation7] sm:$0xff] %v124
    // Predicated region
    $region22: #{tpu_custom_call.1} parent=1 // pred_check
      _
    $region23: #{tpu_custom_call.1} parent=1 // pred_check_branch
      %129 = sbr.rel (0) target = $region25
    $region24: #{tpu_custom_call.1} parent=1 // pred_region
      %s131 = ssub.s32 128, 128
      %132 = vsyncadd [#allocation4], %s131
      %s134 = sshll.u32 [#allocation7], 4
      %s135 = int_to_ptr.vmem [resolvable:$true] %s134
      %137 = dma.vmem_to_hbm [thread:$0]  %s135, 128, %s3, [#allocation4]
    $region25: #{tpu_custom_call.1} parent=1 // pred_fallthru
      _
    // Predicated region
    $region26: #{tpu_custom_call.1} parent=1 // pred_check
      _
    $region27: #{tpu_custom_call.1} parent=1 // pred_check_branch
      %139 = sbr.rel (0) target = $region29
    $region28: #{tpu_custom_call.1} parent=1 // pred_region
      %140 = dma.done [#allocation4], 128
    $region29: #{tpu_custom_call.1} parent=1 // pred_fallthru
      _
    %141 = vsyncpa [#allocation3], 1
    %142 = vsyncpa [#allocation6], 1
    %143 = vsyncpa [#allocation4], 1

</llo_original>
